<compile_context>
chip_gen: v7x
topology: tpu7x:2x2x1
jax: 0.10.0
libtpu: 0.0.40
codegen_flags: <defaults>
</compile_context>

<pallas_src>
import numpy as np
import jax
import jax.numpy as jnp
from jax import lax
from jax.experimental import pallas as pl
from jax.experimental.pallas import tpu as pltpu


def _lstm_kernel(x_ref, wih_ref, whh_ref, b_ref, wfc_ref, bfc_ref, y_ref, xw_ref):
    # x_ref:   (T*B, I)  time-major, rows grouped per timestep (B rows each)
    # wih_ref: (I, 4H)   fused input weights, gate order [i, f, o, g]
    # whh_ref: (H, 4H)   fused recurrent weights, same order
    # b_ref:   (1, 4H)   fused bias (bias_ih + bias_hh)
    # wfc_ref: (H, O), bfc_ref: (1, O)
    # y_ref:   (B, O)
    # xw_ref:  (T*B, 4H) VMEM scratch for the hoisted input projection
    TB, _I = x_ref.shape
    H4 = whh_ref.shape[1]
    H = H4 // 4
    B = y_ref.shape[0]
    T = TB // B

    # ---- Hoisted input projection (independent of h -> off the sequential
    # critical path): one fused matmul for ALL timesteps, bias folded in.
    xw_ref[...] = (
        jnp.dot(x_ref[...], wih_ref[...], preferred_element_type=jnp.float32)
        + b_ref[...]
    )

    # ---- Loop-invariant recurrent weight, loaded once (H x 4H = 4 vregs).
    w_hh = whh_ref[...]

    h = jnp.zeros((B, H), jnp.float32)
    c = jnp.zeros((B, H), jnp.float32)

    # ---- Sequential recurrence.  T is small and static -> full static unroll
    # gives the scheduler cross-step visibility.  One MXU matmul per step.
    for t in range(T):
        z = xw_ref[pl.ds(t * B, B), :] + jnp.dot(
            h, w_hh, preferred_element_type=jnp.float32
        )  # (B, 4H), columns = [i | f | o | g]
        sg = jax.nn.sigmoid(z[:, : 3 * H])   # fused i|f|o slab: one wide EUP push
        g = jnp.tanh(z[:, 3 * H:])           # g gate
        i_g = sg[:, :H]
        f_g = sg[:, H:2 * H]
        o_g = sg[:, 2 * H:]
        c = f_g * c + i_g * g
        h = o_g * jnp.tanh(c)

    # ---- Final Linear on the last hidden state (one-time store, off the
    # per-step critical path).
    y_ref[...] = (
        jnp.dot(h, wfc_ref[...], preferred_element_type=jnp.float32) + bfc_ref[...]
    )


def raw_lstm_forward(x, w_ih, w_hh, b_ih, b_hh, w_fc, b_fc):
    """Forward of RawLSTM with PyTorch parameter layout.

    x:     (B, T, I) float32, batch_first like nn.LSTM(batch_first=True)
    w_ih:  (4H, I)  nn.LSTM weight_ih_l0, gate order [i, f, g, o]
    w_hh:  (4H, H)  nn.LSTM weight_hh_l0
    b_ih:  (4H,)    nn.LSTM bias_ih_l0
    b_hh:  (4H,)    nn.LSTM bias_hh_l0
    w_fc:  (O, H)   nn.Linear weight
    b_fc:  (O,)     nn.Linear bias
    Returns (B, O).
    """
    B, T, I = x.shape
    H = w_hh.shape[1]
    O = w_fc.shape[0]

    # Reorder gates [i, f, g, o] -> [i, f, o, g] and fuse/transpose for
    # right-multiplication inside the kernel.
    perm = jnp.concatenate(
        [jnp.arange(0, 2 * H), jnp.arange(3 * H, 4 * H), jnp.arange(2 * H, 3 * H)]
    )
    wih_f = jnp.transpose(w_ih)[:, perm]      # (I, 4H)
    whh_f = jnp.transpose(w_hh)[:, perm]      # (H, 4H)
    b_f = (b_ih + b_hh)[perm][None, :]        # (1, 4H)
    wfc_t = jnp.transpose(w_fc)               # (H, O)
    bfc = b_fc[None, :]                       # (1, O)

    # Time-major layout; pad batch up to the f32 sublane count (8) so every
    # vreg / MXU row block is filled.  Padded rows never mix with real rows.
    Bp = max(8, ((B + 7) // 8) * 8)
    x_tm = jnp.transpose(x, (1, 0, 2))        # (T, B, I)
    if Bp != B:
        x_tm = jnp.pad(x_tm, ((0, 0), (0, Bp - B), (0, 0)))
    x_flat = x_tm.reshape(T * Bp, I)          # rows grouped by timestep

    vmem = pl.BlockSpec(memory_space=pltpu.MemorySpace.VMEM)
    y = pl.pallas_call(
        _lstm_kernel,
        out_shape=jax.ShapeDtypeStruct((Bp, O), jnp.float32),
        in_specs=[vmem] * 6,
        out_specs=vmem,
        scratch_shapes=[pltpu.VMEM((T * Bp, 4 * H), jnp.float32)],
    )(x_flat, wih_f, whh_f, b_f, wfc_t, bfc)
    return y[:B]


def _reference(x, w_ih, w_hh, b_ih, b_hh, w_fc, b_fc):
    """Pure-JAX reference implementing PyTorch nn.LSTM + nn.Linear semantics."""
    B, T, I = x.shape
    H = w_hh.shape[1]
    wih_t = jnp.transpose(w_ih)   # (I, 4H), PyTorch gate order [i, f, g, o]
    whh_t = jnp.transpose(w_hh)   # (H, 4H)
    b = (b_ih + b_hh)[None, :]

    def step(carry, x_t):
        h, c = carry
        z = x_t @ wih_t + h @ whh_t + b
        i_g = jax.nn.sigmoid(z[:, 0 * H:1 * H])
        f_g = jax.nn.sigmoid(z[:, 1 * H:2 * H])
        g_g = jnp.tanh(z[:, 2 * H:3 * H])
        o_g = jax.nn.sigmoid(z[:, 3 * H:4 * H])
        c_new = f_g * c + i_g * g_g
        h_new = o_g * jnp.tanh(c_new)
        return (h_new, c_new), None

    h0 = jnp.zeros((B, H), jnp.float32)
    c0 = jnp.zeros((B, H), jnp.float32)
    (h_last, _), _ = lax.scan(step, (h0, c0), jnp.transpose(x, (1, 0, 2)))
    return h_last @ jnp.transpose(w_fc) + b_fc[None, :]


if __name__ == "__main__":
    # Shapes consistent with RawLSTM(input_size=1, hidden_size=32, num_layers=1,
    # output_size=1) applied to x of shape (B, T, 1).
    B, T, I, H, O = 2, 8, 1, 32, 1

    key = jax.random.PRNGKey(0)
    ks = jax.random.split(key, 7)
    bound = 1.0 / np.sqrt(H)  # PyTorch default init uniform(-1/sqrt(H), 1/sqrt(H))

    x = jax.random.normal(ks[0], (B, T, I), dtype=jnp.float32)
    w_ih = jax.random.uniform(ks[1], (4 * H, I), jnp.float32, -bound, bound)
    w_hh = jax.random.uniform(ks[2], (4 * H, H), jnp.float32, -bound, bound)
    b_ih = jax.random.uniform(ks[3], (4 * H,), jnp.float32, -bound, bound)
    b_hh = jax.random.uniform(ks[4], (4 * H,), jnp.float32, -bound, bound)
    w_fc = jax.random.uniform(ks[5], (O, H), jnp.float32, -bound, bound)
    b_fc = jax.random.uniform(ks[6], (O,), jnp.float32, -bound, bound)

    y = jax.block_until_ready(raw_lstm_forward(x, w_ih, w_hh, b_ih, b_hh, w_fc, b_fc))
    y_ref = jax.block_until_ready(_reference(x, w_ih, w_hh, b_ih, b_hh, w_fc, b_fc))
    np.testing.assert_allclose(np.asarray(y), np.asarray(y_ref), rtol=1e-5, atol=1e-5)

    print("KERNEL_OK")
</pallas_src>

<mosaic_0001>
module attributes {stable_mosaic.version = 11 : i64} {
  func.func @_lstm_kernel(%arg0: memref<64x1xf32, #tpu.memory_space<vmem>>, %arg1: memref<1x128xf32, #tpu.memory_space<vmem>>, %arg2: memref<32x128xf32, #tpu.memory_space<vmem>>, %arg3: memref<1x128xf32, #tpu.memory_space<vmem>>, %arg4: memref<32x1xf32, #tpu.memory_space<vmem>>, %arg5: memref<1x1xf32, #tpu.memory_space<vmem>>, %arg6: memref<8x1xf32, #tpu.memory_space<vmem>>, %arg7: memref<64x128xf32, #tpu.memory_space<vmem>>) attributes {dimension_semantics = [], scalar_prefetch = 0 : i64, scratch_operands = 1 : i64, tpu.core_type = #tpu.core_type<tc>} {
    %c0 = arith.constant 0 : index
    %c0_0 = arith.constant 0 : index
    %0 = vector.load %arg0[%c0, %c0_0] : memref<64x1xf32, #tpu.memory_space<vmem>>, vector<64x1xf32>
    %c0_1 = arith.constant 0 : index
    %c0_2 = arith.constant 0 : index
    %1 = vector.load %arg1[%c0_1, %c0_2] : memref<1x128xf32, #tpu.memory_space<vmem>>, vector<1x128xf32>
    %cst = arith.constant dense<0.000000e+00> : vector<64x128xf32>
    %2 = tpu.matmul %0, %1, %cst {dimension_numbers = #tpu.dot_dimension_numbers<[1], [0], [0], [1], [0, 0, 1, 1], [], []>} : vector<64x1xf32>, vector<1x128xf32>, vector<64x128xf32> -> vector<64x128xf32>
    %c0_3 = arith.constant 0 : index
    %c0_4 = arith.constant 0 : index
    %3 = vector.load %arg3[%c0_3, %c0_4] : memref<1x128xf32, #tpu.memory_space<vmem>>, vector<1x128xf32>
    %4 = vector.broadcast %3 : vector<1x128xf32> to vector<64x128xf32>
    %5 = arith.addf %2, %4 : vector<64x128xf32>
    %c0_5 = arith.constant 0 : index
    %c0_6 = arith.constant 0 : index
    %6 = vector.load %arg7[%c0_5, %c0_6] : memref<64x128xf32, #tpu.memory_space<vmem>>, vector<64x128xf32>
    tpu.vector_store %arg7[%c0_5, %c0_6], %5 {strides = array<i32>} : memref<64x128xf32, #tpu.memory_space<vmem>>, vector<64x128xf32>,
    %c0_7 = arith.constant 0 : index
    %c0_8 = arith.constant 0 : index
    %7 = vector.load %arg2[%c0_7, %c0_8] : memref<32x128xf32, #tpu.memory_space<vmem>>, vector<32x128xf32>
    %cst_9 = arith.constant 0.000000e+00 : f32
    %8 = vector.broadcast %cst_9 : f32 to vector<8x32xf32>
    %cst_10 = arith.constant 0.000000e+00 : f32
    %9 = vector.broadcast %cst_10 : f32 to vector<8x32xf32>
    %c0_11 = arith.constant 0 : index
    %c0_12 = arith.constant 0 : index
    %10 = vector.load %arg7[%c0_11, %c0_12] : memref<64x128xf32, #tpu.memory_space<vmem>>, vector<8x128xf32>
    %cst_13 = arith.constant dense<0.000000e+00> : vector<8x128xf32>
    %11 = tpu.matmul %8, %7, %cst_13 {dimension_numbers = #tpu.dot_dimension_numbers<[1], [0], [0], [1], [0, 0, 1, 1], [], []>} : vector<8x32xf32>, vector<32x128xf32>, vector<8x128xf32> -> vector<8x128xf32>
    %12 = arith.addf %10, %11 : vector<8x128xf32>
    %13 = vector.extract_strided_slice %12 {offsets = [0, 0], sizes = [8, 96], strides = [1, 1]} : vector<8x128xf32> to vector<8x96xf32>
    %14 = arith.negf %13 : vector<8x96xf32>
    %15 = math.exp %14 : vector<8x96xf32>
    %cst_14 = arith.constant 1.000000e+00 : f32
    %16 = vector.broadcast %cst_14 : f32 to vector<8x96xf32>
    %17 = arith.addf %16, %15 : vector<8x96xf32>
    %18 = arith.divf %16, %17 : vector<8x96xf32>
    %19 = vector.extract_strided_slice %12 {offsets = [0, 96], sizes = [8, 32], strides = [1, 1]} : vector<8x128xf32> to vector<8x32xf32>
    %20 = math.tanh %19 : vector<8x32xf32>
    %21 = vector.extract_strided_slice %18 {offsets = [0, 0], sizes = [8, 32], strides = [1, 1]} : vector<8x96xf32> to vector<8x32xf32>
    %22 = vector.extract_strided_slice %18 {offsets = [0, 32], sizes = [8, 32], strides = [1, 1]} : vector<8x96xf32> to vector<8x32xf32>
    %23 = vector.extract_strided_slice %18 {offsets = [0, 64], sizes = [8, 32], strides = [1, 1]} : vector<8x96xf32> to vector<8x32xf32>
    %24 = arith.mulf %22, %9 : vector<8x32xf32>
    %25 = arith.mulf %21, %20 : vector<8x32xf32>
    %26 = arith.addf %24, %25 : vector<8x32xf32>
    %27 = math.tanh %26 : vector<8x32xf32>
    %28 = arith.mulf %23, %27 : vector<8x32xf32>
    %c8 = arith.constant 8 : index
    %c0_15 = arith.constant 0 : index
    %29 = vector.load %arg7[%c8, %c0_15] : memref<64x128xf32, #tpu.memory_space<vmem>>, vector<8x128xf32>
    %cst_16 = arith.constant dense<0.000000e+00> : vector<8x128xf32>
    %30 = tpu.matmul %28, %7, %cst_16 {dimension_numbers = #tpu.dot_dimension_numbers<[1], [0], [0], [1], [0, 0, 1, 1], [], []>} : vector<8x32xf32>, vector<32x128xf32>, vector<8x128xf32> -> vector<8x128xf32>
    %31 = arith.addf %29, %30 : vector<8x128xf32>
    %32 = vector.extract_strided_slice %31 {offsets = [0, 0], sizes = [8, 96], strides = [1, 1]} : vector<8x128xf32> to vector<8x96xf32>
    %33 = arith.negf %32 : vector<8x96xf32>
    %34 = math.exp %33 : vector<8x96xf32>
    %cst_17 = arith.constant 1.000000e+00 : f32
    %35 = vector.broadcast %cst_17 : f32 to vector<8x96xf32>
    %36 = arith.addf %35, %34 : vector<8x96xf32>
    %37 = arith.divf %35, %36 : vector<8x96xf32>
    %38 = vector.extract_strided_slice %31 {offsets = [0, 96], sizes = [8, 32], strides = [1, 1]} : vector<8x128xf32> to vector<8x32xf32>
    %39 = math.tanh %38 : vector<8x32xf32>
    %40 = vector.extract_strided_slice %37 {offsets = [0, 0], sizes = [8, 32], strides = [1, 1]} : vector<8x96xf32> to vector<8x32xf32>
    %41 = vector.extract_strided_slice %37 {offsets = [0, 32], sizes = [8, 32], strides = [1, 1]} : vector<8x96xf32> to vector<8x32xf32>
    %42 = vector.extract_strided_slice %37 {offsets = [0, 64], sizes = [8, 32], strides = [1, 1]} : vector<8x96xf32> to vector<8x32xf32>
    %43 = arith.mulf %41, %26 : vector<8x32xf32>
    %44 = arith.mulf %40, %39 : vector<8x32xf32>
    %45 = arith.addf %43, %44 : vector<8x32xf32>
    %46 = math.tanh %45 : vector<8x32xf32>
    %47 = arith.mulf %42, %46 : vector<8x32xf32>
    %c16 = arith.constant 16 : index
    %c0_18 = arith.constant 0 : index
    %48 = vector.load %arg7[%c16, %c0_18] : memref<64x128xf32, #tpu.memory_space<vmem>>, vector<8x128xf32>
    %cst_19 = arith.constant dense<0.000000e+00> : vector<8x128xf32>
    %49 = tpu.matmul %47, %7, %cst_19 {dimension_numbers = #tpu.dot_dimension_numbers<[1], [0], [0], [1], [0, 0, 1, 1], [], []>} : vector<8x32xf32>, vector<32x128xf32>, vector<8x128xf32> -> vector<8x128xf32>
    %50 = arith.addf %48, %49 : vector<8x128xf32>
    %51 = vector.extract_strided_slice %50 {offsets = [0, 0], sizes = [8, 96], strides = [1, 1]} : vector<8x128xf32> to vector<8x96xf32>
    %52 = arith.negf %51 : vector<8x96xf32>
    %53 = math.exp %52 : vector<8x96xf32>
    %cst_20 = arith.constant 1.000000e+00 : f32
    %54 = vector.broadcast %cst_20 : f32 to vector<8x96xf32>
    %55 = arith.addf %54, %53 : vector<8x96xf32>
    %56 = arith.divf %54, %55 : vector<8x96xf32>
    %57 = vector.extract_strided_slice %50 {offsets = [0, 96], sizes = [8, 32], strides = [1, 1]} : vector<8x128xf32> to vector<8x32xf32>
    %58 = math.tanh %57 : vector<8x32xf32>
    %59 = vector.extract_strided_slice %56 {offsets = [0, 0], sizes = [8, 32], strides = [1, 1]} : vector<8x96xf32> to vector<8x32xf32>
    %60 = vector.extract_strided_slice %56 {offsets = [0, 32], sizes = [8, 32], strides = [1, 1]} : vector<8x96xf32> to vector<8x32xf32>
    %61 = vector.extract_strided_slice %56 {offsets = [0, 64], sizes = [8, 32], strides = [1, 1]} : vector<8x96xf32> to vector<8x32xf32>
    %62 = arith.mulf %60, %45 : vector<8x32xf32>
    %63 = arith.mulf %59, %58 : vector<8x32xf32>
    %64 = arith.addf %62, %63 : vector<8x32xf32>
    %65 = math.tanh %64 : vector<8x32xf32>
    %66 = arith.mulf %61, %65 : vector<8x32xf32>
    %c24 = arith.constant 24 : index
    %c0_21 = arith.constant 0 : index
    %67 = vector.load %arg7[%c24, %c0_21] : memref<64x128xf32, #tpu.memory_space<vmem>>, vector<8x128xf32>
    %cst_22 = arith.constant dense<0.000000e+00> : vector<8x128xf32>
    %68 = tpu.matmul %66, %7, %cst_22 {dimension_numbers = #tpu.dot_dimension_numbers<[1], [0], [0], [1], [0, 0, 1, 1], [], []>} : vector<8x32xf32>, vector<32x128xf32>, vector<8x128xf32> -> vector<8x128xf32>
    %69 = arith.addf %67, %68 : vector<8x128xf32>
    %70 = vector.extract_strided_slice %69 {offsets = [0, 0], sizes = [8, 96], strides = [1, 1]} : vector<8x128xf32> to vector<8x96xf32>
    %71 = arith.negf %70 : vector<8x96xf32>
    %72 = math.exp %71 : vector<8x96xf32>
    %cst_23 = arith.constant 1.000000e+00 : f32
    %73 = vector.broadcast %cst_23 : f32 to vector<8x96xf32>
    %74 = arith.addf %73, %72 : vector<8x96xf32>
    %75 = arith.divf %73, %74 : vector<8x96xf32>
    %76 = vector.extract_strided_slice %69 {offsets = [0, 96], sizes = [8, 32], strides = [1, 1]} : vector<8x128xf32> to vector<8x32xf32>
    %77 = math.tanh %76 : vector<8x32xf32>
    %78 = vector.extract_strided_slice %75 {offsets = [0, 0], sizes = [8, 32], strides = [1, 1]} : vector<8x96xf32> to vector<8x32xf32>
    %79 = vector.extract_strided_slice %75 {offsets = [0, 32], sizes = [8, 32], strides = [1, 1]} : vector<8x96xf32> to vector<8x32xf32>
    %80 = vector.extract_strided_slice %75 {offsets = [0, 64], sizes = [8, 32], strides = [1, 1]} : vector<8x96xf32> to vector<8x32xf32>
    %81 = arith.mulf %79, %64 : vector<8x32xf32>
    %82 = arith.mulf %78, %77 : vector<8x32xf32>
    %83 = arith.addf %81, %82 : vector<8x32xf32>
    %84 = math.tanh %83 : vector<8x32xf32>
    %85 = arith.mulf %80, %84 : vector<8x32xf32>
    %c32 = arith.constant 32 : index
    %c0_24 = arith.constant 0 : index
    %86 = vector.load %arg7[%c32, %c0_24] : memref<64x128xf32, #tpu.memory_space<vmem>>, vector<8x128xf32>
    %cst_25 = arith.constant dense<0.000000e+00> : vector<8x128xf32>
    %87 = tpu.matmul %85, %7, %cst_25 {dimension_numbers = #tpu.dot_dimension_numbers<[1], [0], [0], [1], [0, 0, 1, 1], [], []>} : vector<8x32xf32>, vector<32x128xf32>, vector<8x128xf32> -> vector<8x128xf32>
    %88 = arith.addf %86, %87 : vector<8x128xf32>
    %89 = vector.extract_strided_slice %88 {offsets = [0, 0], sizes = [8, 96], strides = [1, 1]} : vector<8x128xf32> to vector<8x96xf32>
    %90 = arith.negf %89 : vector<8x96xf32>
    %91 = math.exp %90 : vector<8x96xf32>
    %cst_26 = arith.constant 1.000000e+00 : f32
    %92 = vector.broadcast %cst_26 : f32 to vector<8x96xf32>
    %93 = arith.addf %92, %91 : vector<8x96xf32>
    %94 = arith.divf %92, %93 : vector<8x96xf32>
    %95 = vector.extract_strided_slice %88 {offsets = [0, 96], sizes = [8, 32], strides = [1, 1]} : vector<8x128xf32> to vector<8x32xf32>
    %96 = math.tanh %95 : vector<8x32xf32>
    %97 = vector.extract_strided_slice %94 {offsets = [0, 0], sizes = [8, 32], strides = [1, 1]} : vector<8x96xf32> to vector<8x32xf32>
    %98 = vector.extract_strided_slice %94 {offsets = [0, 32], sizes = [8, 32], strides = [1, 1]} : vector<8x96xf32> to vector<8x32xf32>
    %99 = vector.extract_strided_slice %94 {offsets = [0, 64], sizes = [8, 32], strides = [1, 1]} : vector<8x96xf32> to vector<8x32xf32>
    %100 = arith.mulf %98, %83 : vector<8x32xf32>
    %101 = arith.mulf %97, %96 : vector<8x32xf32>
    %102 = arith.addf %100, %101 : vector<8x32xf32>
    %103 = math.tanh %102 : vector<8x32xf32>
    %104 = arith.mulf %99, %103 : vector<8x32xf32>
    %c40 = arith.constant 40 : index
    %c0_27 = arith.constant 0 : index
    %105 = vector.load %arg7[%c40, %c0_27] : memref<64x128xf32, #tpu.memory_space<vmem>>, vector<8x128xf32>
    %cst_28 = arith.constant dense<0.000000e+00> : vector<8x128xf32>
    %106 = tpu.matmul %104, %7, %cst_28 {dimension_numbers = #tpu.dot_dimension_numbers<[1], [0], [0], [1], [0, 0, 1, 1], [], []>} : vector<8x32xf32>, vector<32x128xf32>, vector<8x128xf32> -> vector<8x128xf32>
    %107 = arith.addf %105, %106 : vector<8x128xf32>
    %108 = vector.extract_strided_slice %107 {offsets = [0, 0], sizes = [8, 96], strides = [1, 1]} : vector<8x128xf32> to vector<8x96xf32>
    %109 = arith.negf %108 : vector<8x96xf32>
    %110 = math.exp %109 : vector<8x96xf32>
    %cst_29 = arith.constant 1.000000e+00 : f32
    %111 = vector.broadcast %cst_29 : f32 to vector<8x96xf32>
    %112 = arith.addf %111, %110 : vector<8x96xf32>
    %113 = arith.divf %111, %112 : vector<8x96xf32>
    %114 = vector.extract_strided_slice %107 {offsets = [0, 96], sizes = [8, 32], strides = [1, 1]} : vector<8x128xf32> to vector<8x32xf32>
    %115 = math.tanh %114 : vector<8x32xf32>
    %116 = vector.extract_strided_slice %113 {offsets = [0, 0], sizes = [8, 32], strides = [1, 1]} : vector<8x96xf32> to vector<8x32xf32>
    %117 = vector.extract_strided_slice %113 {offsets = [0, 32], sizes = [8, 32], strides = [1, 1]} : vector<8x96xf32> to vector<8x32xf32>
    %118 = vector.extract_strided_slice %113 {offsets = [0, 64], sizes = [8, 32], strides = [1, 1]} : vector<8x96xf32> to vector<8x32xf32>
    %119 = arith.mulf %117, %102 : vector<8x32xf32>
    %120 = arith.mulf %116, %115 : vector<8x32xf32>
    %121 = arith.addf %119, %120 : vector<8x32xf32>
    %122 = math.tanh %121 : vector<8x32xf32>
    %123 = arith.mulf %118, %122 : vector<8x32xf32>
    %c48 = arith.constant 48 : index
    %c0_30 = arith.constant 0 : index
    %124 = vector.load %arg7[%c48, %c0_30] : memref<64x128xf32, #tpu.memory_space<vmem>>, vector<8x128xf32>
    %cst_31 = arith.constant dense<0.000000e+00> : vector<8x128xf32>
    %125 = tpu.matmul %123, %7, %cst_31 {dimension_numbers = #tpu.dot_dimension_numbers<[1], [0], [0], [1], [0, 0, 1, 1], [], []>} : vector<8x32xf32>, vector<32x128xf32>, vector<8x128xf32> -> vector<8x128xf32>
    %126 = arith.addf %124, %125 : vector<8x128xf32>
    %127 = vector.extract_strided_slice %126 {offsets = [0, 0], sizes = [8, 96], strides = [1, 1]} : vector<8x128xf32> to vector<8x96xf32>
    %128 = arith.negf %127 : vector<8x96xf32>
    %129 = math.exp %128 : vector<8x96xf32>
    %cst_32 = arith.constant 1.000000e+00 : f32
    %130 = vector.broadcast %cst_32 : f32 to vector<8x96xf32>
    %131 = arith.addf %130, %129 : vector<8x96xf32>
    %132 = arith.divf %130, %131 : vector<8x96xf32>
    %133 = vector.extract_strided_slice %126 {offsets = [0, 96], sizes = [8, 32], strides = [1, 1]} : vector<8x128xf32> to vector<8x32xf32>
    %134 = math.tanh %133 : vector<8x32xf32>
    %135 = vector.extract_strided_slice %132 {offsets = [0, 0], sizes = [8, 32], strides = [1, 1]} : vector<8x96xf32> to vector<8x32xf32>
    %136 = vector.extract_strided_slice %132 {offsets = [0, 32], sizes = [8, 32], strides = [1, 1]} : vector<8x96xf32> to vector<8x32xf32>
    %137 = vector.extract_strided_slice %132 {offsets = [0, 64], sizes = [8, 32], strides = [1, 1]} : vector<8x96xf32> to vector<8x32xf32>
    %138 = arith.mulf %136, %121 : vector<8x32xf32>
    %139 = arith.mulf %135, %134 : vector<8x32xf32>
    %140 = arith.addf %138, %139 : vector<8x32xf32>
    %141 = math.tanh %140 : vector<8x32xf32>
    %142 = arith.mulf %137, %141 : vector<8x32xf32>
    %c56 = arith.constant 56 : index
    %c0_33 = arith.constant 0 : index
    %143 = vector.load %arg7[%c56, %c0_33] : memref<64x128xf32, #tpu.memory_space<vmem>>, vector<8x128xf32>
    %cst_34 = arith.constant dense<0.000000e+00> : vector<8x128xf32>
    %144 = tpu.matmul %142, %7, %cst_34 {dimension_numbers = #tpu.dot_dimension_numbers<[1], [0], [0], [1], [0, 0, 1, 1], [], []>} : vector<8x32xf32>, vector<32x128xf32>, vector<8x128xf32> -> vector<8x128xf32>
    %145 = arith.addf %143, %144 : vector<8x128xf32>
    %146 = vector.extract_strided_slice %145 {offsets = [0, 0], sizes = [8, 96], strides = [1, 1]} : vector<8x128xf32> to vector<8x96xf32>
    %147 = arith.negf %146 : vector<8x96xf32>
    %148 = math.exp %147 : vector<8x96xf32>
    %cst_35 = arith.constant 1.000000e+00 : f32
    %149 = vector.broadcast %cst_35 : f32 to vector<8x96xf32>
    %150 = arith.addf %149, %148 : vector<8x96xf32>
    %151 = arith.divf %149, %150 : vector<8x96xf32>
    %152 = vector.extract_strided_slice %145 {offsets = [0, 96], sizes = [8, 32], strides = [1, 1]} : vector<8x128xf32> to vector<8x32xf32>
    %153 = math.tanh %152 : vector<8x32xf32>
    %154 = vector.extract_strided_slice %151 {offsets = [0, 0], sizes = [8, 32], strides = [1, 1]} : vector<8x96xf32> to vector<8x32xf32>
    %155 = vector.extract_strided_slice %151 {offsets = [0, 32], sizes = [8, 32], strides = [1, 1]} : vector<8x96xf32> to vector<8x32xf32>
    %156 = vector.extract_strided_slice %151 {offsets = [0, 64], sizes = [8, 32], strides = [1, 1]} : vector<8x96xf32> to vector<8x32xf32>
    %157 = arith.mulf %155, %140 : vector<8x32xf32>
    %158 = arith.mulf %154, %153 : vector<8x32xf32>
    %159 = arith.addf %157, %158 : vector<8x32xf32>
    %160 = math.tanh %159 : vector<8x32xf32>
    %161 = arith.mulf %156, %160 : vector<8x32xf32>
    %c0_36 = arith.constant 0 : index
    %c0_37 = arith.constant 0 : index
    %162 = vector.load %arg4[%c0_36, %c0_37] : memref<32x1xf32, #tpu.memory_space<vmem>>, vector<32x1xf32>
    %cst_38 = arith.constant dense<0.000000e+00> : vector<8x1xf32>
    %163 = tpu.matmul %161, %162, %cst_38 {dimension_numbers = #tpu.dot_dimension_numbers<[1], [0], [0], [1], [0, 0, 1, 1], [], []>} : vector<8x32xf32>, vector<32x1xf32>, vector<8x1xf32> -> vector<8x1xf32>
    %c0_39 = arith.constant 0 : index
    %c0_40 = arith.constant 0 : index
    %164 = vector.load %arg5[%c0_39, %c0_40] : memref<1x1xf32, #tpu.memory_space<vmem>>, vector<1x1xf32>
    %165 = vector.broadcast %164 : vector<1x1xf32> to vector<8x1xf32>
    %166 = arith.addf %163, %165 : vector<8x1xf32>
    %c0_41 = arith.constant 0 : index
    %c0_42 = arith.constant 0 : index
    %167 = vector.load %arg6[%c0_41, %c0_42] : memref<8x1xf32, #tpu.memory_space<vmem>>, vector<8x1xf32>
    tpu.vector_store %arg6[%c0_41, %c0_42], %166 {strides = array<i32>} : memref<8x1xf32, #tpu.memory_space<vmem>>, vector<8x1xf32>,
    return
  }
}

</mosaic_0001>

<llo_original>
// kernel: tpu_custom_call.1
$region0: #{tpu_custom_call.1}
  #allocation0 [shape = 'u32[]', space=smem, size = 0x4, offset = 0x4, fixed_abs, tag = 'smem constant byte address 0x4 - core index']
  #allocation1 [shape = 'u32[144,128]{1,0:T(1,128)}', space=vmem, size = 0x12000, scoped, tag = 'internal scratch']
  #allocation2 [shape = 'f32[64,128]{1,0:T(8,128)}', space=vmem, size = 0x8000, scoped, tag = 'scratch operand']
  #allocation3 [shape = 'f32[1,1]{1,0:T(1,128)S(1)}', space=vmem, size = 0x200, scoped, tag = 'scoped memory for tpu_custom_call.1']
  %s0 = inlined_call_operand.vmem [shape: f32[64,1], index: 0, kind: input, shape index: {}]
  %s1 = inlined_call_operand.vmem [shape: f32[1,128], index: 1, kind: input, shape index: {}]
  %s2 = inlined_call_operand.vmem [shape: f32[32,128], index: 2, kind: input, shape index: {}]
  %s3 = inlined_call_operand.vmem [shape: f32[1,128], index: 3, kind: input, shape index: {}]
  %s4 = inlined_call_operand.vmem [shape: f32[32,1], index: 4, kind: input, shape index: {}]
  %s5 = inlined_call_operand.<no memory space> [shape: f32[1,1], index: 5, kind: input, shape index: {}]
  %s6 = inlined_call_operand.vmem [shape: f32[8,1], index: 6, kind: output, shape index: {}]
  %s7 = sld [smem:[#allocation0]]
  $region34: #{tpu_custom_call.1} parent=0
    _
  %s9 = ssub.s32 1, %s7
  %s10 = scalar_select 0, %s9, %s7
  %v11 = vstv %s5
  %12 = vst [vmem:[#allocation3] sm:$0x1] %v11
  // Predicated region
  $region2: #{tpu_custom_call.1} parent=0 // pred_check
    _
  $region3: #{tpu_custom_call.1} parent=0 // pred_check_branch
    %14 = sbr.rel (0) target = $region5
  $region4: #{tpu_custom_call.1} parent=0 // pred_region
    _
  $region5: #{tpu_custom_call.1} parent=0 // pred_fallthru
    _
  // Predicated region
  $region6: #{tpu_custom_call.1} parent=0 // pred_check
    _
  $region7: #{tpu_custom_call.1} parent=0 // pred_check_branch
    %16 = sbr.rel (0) target = $region9
  $region8: #{tpu_custom_call.1} parent=0 // pred_region
    _
  $region9: #{tpu_custom_call.1} parent=0 // pred_fallthru
    _
  // Predicated region
  $region10: #{tpu_custom_call.1} parent=0 // pred_check
    _
  $region11: #{tpu_custom_call.1} parent=0 // pred_check_branch
    %18 = sbr.rel (0) target = $region13
  $region12: #{tpu_custom_call.1} parent=0 // pred_region
    _
  $region13: #{tpu_custom_call.1} parent=0 // pred_fallthru
    _
  // Predicated region
  $region14: #{tpu_custom_call.1} parent=0 // pred_check
    _
  $region15: #{tpu_custom_call.1} parent=0 // pred_check_branch
    %20 = sbr.rel (0) target = $region17
  $region16: #{tpu_custom_call.1} parent=0 // pred_region
    _
  $region17: #{tpu_custom_call.1} parent=0 // pred_fallthru
    _
  // Predicated region
  $region18: #{tpu_custom_call.1} parent=0 // pred_check
    _
  $region19: #{tpu_custom_call.1} parent=0 // pred_check_branch
    %22 = sbr.rel (0) target = $region21
  $region20: #{tpu_custom_call.1} parent=0 // pred_region
    _
  $region21: #{tpu_custom_call.1} parent=0 // pred_fallthru
    _
  // Predicated region
  $region22: #{tpu_custom_call.1} parent=0 // pred_check
    _
  $region23: #{tpu_custom_call.1} parent=0 // pred_check_branch
    %24 = sbr.rel (0) target = $region25
  $region24: #{tpu_custom_call.1} parent=0 // pred_region
    _
  $region25: #{tpu_custom_call.1} parent=0 // pred_fallthru
    _
  %v25 = vld [vmem:[%s0] sm:$0xff]
  %v26 = vld [vmem:[%s0 + $0x8] sm:$0xff]
  %v27 = vld [vmem:[%s0 + $0x10] sm:$0xff]
  %v28 = vld [vmem:[%s0 + $0x18] sm:$0xff]
  %v29 = vld [vmem:[%s0 + $0x20] sm:$0xff]
  %v30 = vld [vmem:[%s0 + $0x28] sm:$0xff]
  %v31 = vld [vmem:[%s0 + $0x30] sm:$0xff]
  %v32 = vld [vmem:[%s0 + $0x38] sm:$0xff]
  %v33 = vld [vmem:[%s1] sm:$0x1]
  %v34 = vld [vmem:[%s3] sm:$0x1]
  %v36 = vlaneseq
  %v37 = vshrl.u32 %v36, 7
  %v38 = vsub.s32 0, %v37
  %v39 = vrot.slane %v34, %v38
  %vm41 = vcmask 7168
  %v43 = vsel %vm41, %v25, 0
  %v46 = vsel %vm41, %v26, 0
  %v49 = vsel %vm41, %v27, 0
  %v52 = vsel %vm41, %v28, 0
  %v55 = vsel %vm41, %v29, 0
  %v58 = vsel %vm41, %v30, 0
  %v61 = vsel %vm41, %v31, 0
  %v64 = vsel %vm41, %v32, 0
  %vm66 = vcmask 1040384
  %v68 = vsel %vm66, %v33, 0
  %70 = vmatprep.subr.mxu0 0.0
  %71 = vmatpush1.msra.mxu0 %v68
  %72 = vmatprep.subr.mxu0 0.0
  %73 = vmatpush1.msra.mxu0 0.0
  %74 = vmatprep.subr.mxu0 0.0
  %75 = vmatpush1.msra.mxu0 0.0
  %76 = vmatprep.subr.mxu0 0.0
  %77 = vmatpush1.msra.mxu0 0.0
  %78 = vmatprep.subr.mxu0 0.0
  %79 = vmatpush1.msra.mxu0 0.0
  %80 = vmatprep.subr.mxu0 0.0
  %81 = vmatpush1.msra.mxu0 0.0
  %82 = vmatprep.subr.mxu0 0.0
  %83 = vmatpush1.msra.mxu0 0.0
  %84 = vmatprep.subr.mxu0 0.0
  %85 = vmatpush1.msra.mxu0 0.0
  %86 = vmatprep.subr.mxu0 0.0
  %87 = vmatpush1.msra.mxu0 0.0
  %88 = vmatprep.subr.mxu0 0.0
  %89 = vmatpush1.msra.mxu0 0.0
  %90 = vmatprep.subr.mxu0 0.0
  %91 = vmatpush1.msra.mxu0 0.0
  %92 = vmatprep.subr.mxu0 0.0
  %93 = vmatpush1.msra.mxu0 0.0
  %94 = vmatprep.subr.mxu0 0.0
  %95 = vmatpush1.msra.mxu0 0.0
  %96 = vmatprep.subr.mxu0 0.0
  %97 = vmatpush1.msra.mxu0 0.0
  %98 = vmatprep.subr.mxu0 0.0
  %99 = vmatpush1.msra.mxu0 0.0
  %100 = vmatprep.subr.mxu0 0.0
  %101 = vmatpush1.msra.mxu0 0.0
  %102 = vmatprep.subr.mxu0 0.0
  %103 = vmatpush1.msra.mxu0 0.0
  %104 = vmatprep.subr.mxu0 0.0
  %105 = vmatpush1.msra.mxu0 0.0
  %106 = vmatprep.subr.mxu0 0.0
  %107 = vmatpush1.msra.mxu0 0.0
  %108 = vmatprep.subr.mxu0 0.0
  %109 = vmatpush1.msra.mxu0 0.0
  %110 = vmatprep.subr.mxu0 0.0
  %111 = vmatpush1.msra.mxu0 0.0
  %112 = vmatprep.subr.mxu0 0.0
  %113 = vmatpush1.msra.mxu0 0.0
  %114 = vmatprep.subr.mxu0 0.0
  %115 = vmatpush1.msra.mxu0 0.0
  %116 = vmatprep.subr.mxu0 0.0
  %117 = vmatpush1.msra.mxu0 0.0
  %118 = vmatprep.subr.mxu0 0.0
  %119 = vmatpush1.msra.mxu0 0.0
  %120 = vmatprep.subr.mxu0 0.0
  %121 = vmatpush1.msra.mxu0 0.0
  %122 = vmatprep.subr.mxu0 0.0
  %123 = vmatpush1.msra.mxu0 0.0
  %124 = vmatprep.subr.mxu0 0.0
  %125 = vmatpush1.msra.mxu0 0.0
  %126 = vmatprep.subr.mxu0 0.0
  %127 = vmatpush1.msra.mxu0 0.0
  %128 = vmatprep.subr.mxu0 0.0
  %129 = vmatpush1.msra.mxu0 0.0
  %130 = vmatprep.subr.mxu0 0.0
  %131 = vmatpush1.msra.mxu0 0.0
  %132 = vmatprep.subr.mxu0 0.0
  %133 = vmatpush1.msra.mxu0 0.0
  %134 = vmatprep.mubr.f32.mxu0 0.0
  %135 = vmatmul.mubr.f32.gmra.mrb[0].mxu0 %v43
  %v136 = vpop.f32.mrb[0].mxu0
  %v137 = vadd.f32 %v39, %v136
  %v138 = vpop.f32.mrb[0].mxu0
  %139 = vmatprep.mubr.f32.mxu0 0.0
  %140 = vmatmul.mubr.f32.gmra.mrb[0].mxu0 %v46
  %v141 = vpop.f32.mrb[0].mxu0
  %v142 = vadd.f32 %v39, %v141
  %v143 = vpop.f32.mrb[0].mxu0
  %144 = vmatprep.mubr.f32.mxu0 0.0
  %145 = vmatmul.mubr.f32.gmra.mrb[0].mxu0 %v49
  %v146 = vpop.f32.mrb[0].mxu0
  %v147 = vadd.f32 %v39, %v146
  %v148 = vpop.f32.mrb[0].mxu0
  %149 = vmatprep.mubr.f32.mxu0 0.0
  %150 = vmatmul.mubr.f32.gmra.mrb[0].mxu0 %v52
  %v151 = vpop.f32.mrb[0].mxu0
  %v152 = vadd.f32 %v39, %v151
  %v153 = vpop.f32.mrb[0].mxu0
  %154 = vmatprep.mubr.f32.mxu0 0.0
  %155 = vmatmul.mubr.f32.gmra.mrb[0].mxu0 %v55
  %v156 = vpop.f32.mrb[0].mxu0
  %v157 = vadd.f32 %v39, %v156
  %v158 = vpop.f32.mrb[0].mxu0
  %159 = vmatprep.mubr.f32.mxu0 0.0
  %160 = vmatmul.mubr.f32.gmra.mrb[0].mxu0 %v58
  %v161 = vpop.f32.mrb[0].mxu0
  %v162 = vadd.f32 %v39, %v161
  %v163 = vpop.f32.mrb[0].mxu0
  %164 = vmatprep.mubr.f32.mxu0 0.0
  %165 = vmatmul.mubr.f32.gmra.mrb[0].mxu0 %v61
  %v166 = vpop.f32.mrb[0].mxu0
  %v167 = vadd.f32 %v39, %v166
  %v168 = vpop.f32.mrb[0].mxu0
  %169 = vmatprep.mubr.f32.mxu0 0.0
  %170 = vmatmul.mubr.f32.gmra.mrb[0].mxu0 %v64
  %v171 = vpop.f32.mrb[0].mxu0
  %v172 = vadd.f32 %v39, %v171
  %v173 = vpop.f32.mrb[0].mxu0
  %174 = vdwg.mxu0
  %175 = vst [vmem:[#allocation2] sm:$0xff] %v137
  %176 = vst [vmem:[#allocation2 + $0x8] sm:$0xff] %v142
  %177 = vst [vmem:[#allocation2 + $0x10] sm:$0xff] %v147
  %178 = vst [vmem:[#allocation2 + $0x18] sm:$0xff] %v152
  %179 = vst [vmem:[#allocation2 + $0x20] sm:$0xff] %v157
  %180 = vst [vmem:[#allocation2 + $0x28] sm:$0xff] %v162
  %181 = vst [vmem:[#allocation2 + $0x30] sm:$0xff] %v167
  %182 = vst [vmem:[#allocation2 + $0x38] sm:$0xff] %v172
  %v183 = vld [vmem:[%s2] sm:$0xff]
  %v184 = vld [vmem:[%s2 + $0x8] sm:$0xff]
  %v185 = vld [vmem:[%s2 + $0x10] sm:$0xff]
  %v186 = vld [vmem:[%s2 + $0x18] sm:$0xff]
  %v187 = vld [vmem:[#allocation2] sm:$0xff]
  %vm188 = vcmask 261120
  %v190 = vsel %vm188, 0.0, 0
  %192 = vmatprep.subr.mxu0 0.0
  %193 = vmatpush1.msra.mxu0 %v183
  %194 = vmatprep.subr.mxu0 0.0
  %195 = vmatpush1.msra.mxu0 %v184
  %196 = vmatprep.subr.mxu0 0.0
  %197 = vmatpush1.msra.mxu0 %v185
  %198 = vmatprep.subr.mxu0 0.0
  %199 = vmatpush1.msra.mxu0 %v186
  %200 = vmatprep.subr.mxu0 0.0
  %201 = vmatpush1.msra.mxu0 0.0
  %202 = vmatprep.subr.mxu0 0.0
  %203 = vmatpush1.msra.mxu0 0.0
  %204 = vmatprep.subr.mxu0 0.0
  %205 = vmatpush1.msra.mxu0 0.0
  %206 = vmatprep.subr.mxu0 0.0
  %207 = vmatpush1.msra.mxu0 0.0
  %208 = vmatprep.subr.mxu0 0.0
  %209 = vmatpush1.msra.mxu0 0.0
  %210 = vmatprep.subr.mxu0 0.0
  %211 = vmatpush1.msra.mxu0 0.0
  %212 = vmatprep.subr.mxu0 0.0
  %213 = vmatpush1.msra.mxu0 0.0
  %214 = vmatprep.subr.mxu0 0.0
  %215 = vmatpush1.msra.mxu0 0.0
  %216 = vmatprep.subr.mxu0 0.0
  %217 = vmatpush1.msra.mxu0 0.0
  %218 = vmatprep.subr.mxu0 0.0
  %219 = vmatpush1.msra.mxu0 0.0
  %220 = vmatprep.subr.mxu0 0.0
  %221 = vmatpush1.msra.mxu0 0.0
  %222 = vmatprep.subr.mxu0 0.0
  %223 = vmatpush1.msra.mxu0 0.0
  %224 = vmatprep.subr.mxu0 0.0
  %225 = vmatpush1.msra.mxu0 0.0
  %226 = vmatprep.subr.mxu0 0.0
  %227 = vmatpush1.msra.mxu0 0.0
  %228 = vmatprep.subr.mxu0 0.0
  %229 = vmatpush1.msra.mxu0 0.0
  %230 = vmatprep.subr.mxu0 0.0
  %231 = vmatpush1.msra.mxu0 0.0
  %232 = vmatprep.subr.mxu0 0.0
  %233 = vmatpush1.msra.mxu0 0.0
  %234 = vmatprep.subr.mxu0 0.0
  %235 = vmatpush1.msra.mxu0 0.0
  %236 = vmatprep.subr.mxu0 0.0
  %237 = vmatpush1.msra.mxu0 0.0
  %238 = vmatprep.subr.mxu0 0.0
  %239 = vmatpush1.msra.mxu0 0.0
  %240 = vmatprep.subr.mxu0 0.0
  %241 = vmatpush1.msra.mxu0 0.0
  %242 = vmatprep.subr.mxu0 0.0
  %243 = vmatpush1.msra.mxu0 0.0
  %244 = vmatprep.subr.mxu0 0.0
  %245 = vmatpush1.msra.mxu0 0.0
  %246 = vmatprep.subr.mxu0 0.0
  %247 = vmatpush1.msra.mxu0 0.0
  %248 = vmatprep.subr.mxu0 0.0
  %249 = vmatpush1.msra.mxu0 0.0
  %250 = vmatprep.subr.mxu0 0.0
  %251 = vmatpush1.msra.mxu0 0.0
  %252 = vmatprep.subr.mxu0 0.0
  %253 = vmatpush1.msra.mxu0 0.0
  %254 = vmatprep.subr.mxu0 0.0
  %255 = vmatpush1.msra.mxu0 0.0
  %256 = vmatprep.mubr.f32.mxu0 0.0
  %257 = vmatmul.mubr.f32.gmra.mrb[0].mxu0 %v190
  %v258 = vpop.f32.mrb[0].mxu0
  %v259 = vadd.f32 0.0, %v258
  %v260 = vpop.f32.mrb[0].mxu0
  %261 = vdwg.mxu0
  %v262 = vadd.f32 %v187, %v259
  %v263 = vxor.u32 %v262, 2147483648
  %v264 = vmul.f32 %v263, 1.442695
  %v265 = vpow.pop %v264
  %v266 = vadd.f32 %v265, 1.0
  %v267 = vrcp.pop %v266
  %v268 = vmul.f32 1.0, %v267
  %v269 = vtanh.pop %v262
  %v270 = vmul.f32 %v268, 0.0
  %272 = vrot.lane.b32.xlu0 %v269, 32
  %v273 = vpop.permute.xlu0 %272
  %v275 = vmul.f32 %v268, %v273
  %277 = vrot.lane.b32.xlu0 %v275, 32
  %v278 = vpop.permute.xlu0 %277
  %v280 = vadd.f32 %v270, %v278
  %v281 = vtanh.pop %v280
  %283 = vrot.lane.b32.xlu0 %v281, 32
  %v284 = vpop.permute.xlu0 %283
  %v286 = vmul.f32 %v268, %v284
  %v287 = vld [vmem:[#allocation2 + $0x8] sm:$0xff]
  %289 = vrot.lane.b32.xlu0 %v286, 64
  %v290 = vpop.permute.xlu0 %289
  %v291 = vsel %vm188, %v290, 0
  %293 = vmatprep.subr.mxu0 0.0
  %294 = vmatpush1.msra.mxu0 %v183
  %295 = vmatprep.subr.mxu0 0.0
  %296 = vmatpush1.msra.mxu0 %v184
  %297 = vmatprep.subr.mxu0 0.0
  %298 = vmatpush1.msra.mxu0 %v185
  %299 = vmatprep.subr.mxu0 0.0
  %300 = vmatpush1.msra.mxu0 %v186
  %301 = vmatprep.subr.mxu0 0.0
  %302 = vmatpush1.msra.mxu0 0.0
  %303 = vmatprep.subr.mxu0 0.0
  %304 = vmatpush1.msra.mxu0 0.0
  %305 = vmatprep.subr.mxu0 0.0
  %306 = vmatpush1.msra.mxu0 0.0
  %307 = vmatprep.subr.mxu0 0.0
  %308 = vmatpush1.msra.mxu0 0.0
  %309 = vmatprep.subr.mxu0 0.0
  %310 = vmatpush1.msra.mxu0 0.0
  %311 = vmatprep.subr.mxu0 0.0
  %312 = vmatpush1.msra.mxu0 0.0
  %313 = vmatprep.subr.mxu0 0.0
  %314 = vmatpush1.msra.mxu0 0.0
  %315 = vmatprep.subr.mxu0 0.0
  %316 = vmatpush1.msra.mxu0 0.0
  %317 = vmatprep.subr.mxu0 0.0
  %318 = vmatpush1.msra.mxu0 0.0
  %319 = vmatprep.subr.mxu0 0.0
  %320 = vmatpush1.msra.mxu0 0.0
  %321 = vmatprep.subr.mxu0 0.0
  %322 = vmatpush1.msra.mxu0 0.0
  %323 = vmatprep.subr.mxu0 0.0
  %324 = vmatpush1.msra.mxu0 0.0
  %325 = vmatprep.subr.mxu0 0.0
  %326 = vmatpush1.msra.mxu0 0.0
  %327 = vmatprep.subr.mxu0 0.0
  %328 = vmatpush1.msra.mxu0 0.0
  %329 = vmatprep.subr.mxu0 0.0
  %330 = vmatpush1.msra.mxu0 0.0
  %331 = vmatprep.subr.mxu0 0.0
  %332 = vmatpush1.msra.mxu0 0.0
  %333 = vmatprep.subr.mxu0 0.0
  %334 = vmatpush1.msra.mxu0 0.0
  %335 = vmatprep.subr.mxu0 0.0
  %336 = vmatpush1.msra.mxu0 0.0
  %337 = vmatprep.subr.mxu0 0.0
  %338 = vmatpush1.msra.mxu0 0.0
  %339 = vmatprep.subr.mxu0 0.0
  %340 = vmatpush1.msra.mxu0 0.0
  %341 = vmatprep.subr.mxu0 0.0
  %342 = vmatpush1.msra.mxu0 0.0
  %343 = vmatprep.subr.mxu0 0.0
  %344 = vmatpush1.msra.mxu0 0.0
  %345 = vmatprep.subr.mxu0 0.0
  %346 = vmatpush1.msra.mxu0 0.0
  %347 = vmatprep.subr.mxu0 0.0
  %348 = vmatpush1.msra.mxu0 0.0
  %349 = vmatprep.subr.mxu0 0.0
  %350 = vmatpush1.msra.mxu0 0.0
  %351 = vmatprep.subr.mxu0 0.0
  %352 = vmatpush1.msra.mxu0 0.0
  %353 = vmatprep.subr.mxu0 0.0
  %354 = vmatpush1.msra.mxu0 0.0
  %355 = vmatprep.subr.mxu0 0.0
  %356 = vmatpush1.msra.mxu0 0.0
  %357 = vmatprep.mubr.f32.mxu0 0.0
  %358 = vmatmul.mubr.f32.gmra.mrb[0].mxu0 %v291
  %v359 = vpop.f32.mrb[0].mxu0
  %v360 = vadd.f32 0.0, %v359
  %v361 = vpop.f32.mrb[0].mxu0
  %362 = vdwg.mxu0
  %v363 = vadd.f32 %v287, %v360
  %v364 = vxor.u32 %v363, 2147483648
  %v365 = vmul.f32 %v364, 1.442695
  %v366 = vpow.pop %v365
  %v367 = vadd.f32 %v366, 1.0
  %v368 = vrcp.pop %v367
  %v369 = vmul.f32 1.0, %v368
  %v370 = vtanh.pop %v363
  %v371 = vmul.f32 %v369, %v280
  %373 = vrot.lane.b32.xlu0 %v370, 32
  %v374 = vpop.permute.xlu0 %373
  %v376 = vmul.f32 %v369, %v374
  %378 = vrot.lane.b32.xlu0 %v376, 32
  %v379 = vpop.permute.xlu0 %378
  %v381 = vadd.f32 %v371, %v379
  %v382 = vtanh.pop %v381
  %384 = vrot.lane.b32.xlu0 %v382, 32
  %v385 = vpop.permute.xlu0 %384
  %v387 = vmul.f32 %v369, %v385
  %v388 = vld [vmem:[#allocation2 + $0x10] sm:$0xff]
  %390 = vrot.lane.b32.xlu0 %v387, 64
  %v391 = vpop.permute.xlu0 %390
  %v392 = vsel %vm188, %v391, 0
  %394 = vmatprep.subr.mxu0 0.0
  %395 = vmatpush1.msra.mxu0 %v183
  %396 = vmatprep.subr.mxu0 0.0
  %397 = vmatpush1.msra.mxu0 %v184
  %398 = vmatprep.subr.mxu0 0.0
  %399 = vmatpush1.msra.mxu0 %v185
  %400 = vmatprep.subr.mxu0 0.0
  %401 = vmatpush1.msra.mxu0 %v186
  %402 = vmatprep.subr.mxu0 0.0
  %403 = vmatpush1.msra.mxu0 0.0
  %404 = vmatprep.subr.mxu0 0.0
  %405 = vmatpush1.msra.mxu0 0.0
  %406 = vmatprep.subr.mxu0 0.0
  %407 = vmatpush1.msra.mxu0 0.0
  %408 = vmatprep.subr.mxu0 0.0
  %409 = vmatpush1.msra.mxu0 0.0
  %410 = vmatprep.subr.mxu0 0.0
  %411 = vmatpush1.msra.mxu0 0.0
  %412 = vmatprep.subr.mxu0 0.0
  %413 = vmatpush1.msra.mxu0 0.0
  %414 = vmatprep.subr.mxu0 0.0
  %415 = vmatpush1.msra.mxu0 0.0
  %416 = vmatprep.subr.mxu0 0.0
  %417 = vmatpush1.msra.mxu0 0.0
  %418 = vmatprep.subr.mxu0 0.0
  %419 = vmatpush1.msra.mxu0 0.0
  %420 = vmatprep.subr.mxu0 0.0
  %421 = vmatpush1.msra.mxu0 0.0
  %422 = vmatprep.subr.mxu0 0.0
  %423 = vmatpush1.msra.mxu0 0.0
  %424 = vmatprep.subr.mxu0 0.0
  %425 = vmatpush1.msra.mxu0 0.0
  %426 = vmatprep.subr.mxu0 0.0
  %427 = vmatpush1.msra.mxu0 0.0
  %428 = vmatprep.subr.mxu0 0.0
  %429 = vmatpush1.msra.mxu0 0.0
  %430 = vmatprep.subr.mxu0 0.0
  %431 = vmatpush1.msra.mxu0 0.0
  %432 = vmatprep.subr.mxu0 0.0
  %433 = vmatpush1.msra.mxu0 0.0
  %434 = vmatprep.subr.mxu0 0.0
  %435 = vmatpush1.msra.mxu0 0.0
  %436 = vmatprep.subr.mxu0 0.0
  %437 = vmatpush1.msra.mxu0 0.0
  %438 = vmatprep.subr.mxu0 0.0
  %439 = vmatpush1.msra.mxu0 0.0
  %440 = vmatprep.subr.mxu0 0.0
  %441 = vmatpush1.msra.mxu0 0.0
  %442 = vmatprep.subr.mxu0 0.0
  %443 = vmatpush1.msra.mxu0 0.0
  %444 = vmatprep.subr.mxu0 0.0
  %445 = vmatpush1.msra.mxu0 0.0
  %446 = vmatprep.subr.mxu0 0.0
  %447 = vmatpush1.msra.mxu0 0.0
  %448 = vmatprep.subr.mxu0 0.0
  %449 = vmatpush1.msra.mxu0 0.0
  %450 = vmatprep.subr.mxu0 0.0
  %451 = vmatpush1.msra.mxu0 0.0
  %452 = vmatprep.subr.mxu0 0.0
  %453 = vmatpush1.msra.mxu0 0.0
  %454 = vmatprep.subr.mxu0 0.0
  %455 = vmatpush1.msra.mxu0 0.0
  %456 = vmatprep.subr.mxu0 0.0
  %457 = vmatpush1.msra.mxu0 0.0
  %458 = vmatprep.mubr.f32.mxu0 0.0
  %459 = vmatmul.mubr.f32.gmra.mrb[0].mxu0 %v392
  %v460 = vpop.f32.mrb[0].mxu0
  %v461 = vadd.f32 0.0, %v460
  %v462 = vpop.f32.mrb[0].mxu0
  %463 = vdwg.mxu0
  %v464 = vadd.f32 %v388, %v461
  %v465 = vxor.u32 %v464, 2147483648
  %v466 = vmul.f32 %v465, 1.442695
  %v467 = vpow.pop %v466
  %v468 = vadd.f32 %v467, 1.0
  %v469 = vrcp.pop %v468
  %v470 = vmul.f32 1.0, %v469
  %v471 = vtanh.pop %v464
  %v472 = vmul.f32 %v470, %v381
  %474 = vrot.lane.b32.xlu0 %v471, 32
  %v475 = vpop.permute.xlu0 %474
  %v477 = vmul.f32 %v470, %v475
  %479 = vrot.lane.b32.xlu0 %v477, 32
  %v480 = vpop.permute.xlu0 %479
  %v482 = vadd.f32 %v472, %v480
  %v483 = vtanh.pop %v482
  %485 = vrot.lane.b32.xlu0 %v483, 32
  %v486 = vpop.permute.xlu0 %485
  %v488 = vmul.f32 %v470, %v486
  %v489 = vld [vmem:[#allocation2 + $0x18] sm:$0xff]
  %491 = vrot.lane.b32.xlu0 %v488, 64
  %v492 = vpop.permute.xlu0 %491
  %v493 = vsel %vm188, %v492, 0
  %495 = vmatprep.subr.mxu0 0.0
  %496 = vmatpush1.msra.mxu0 %v183
  %497 = vmatprep.subr.mxu0 0.0
  %498 = vmatpush1.msra.mxu0 %v184
  %499 = vmatprep.subr.mxu0 0.0
  %500 = vmatpush1.msra.mxu0 %v185
  %501 = vmatprep.subr.mxu0 0.0
  %502 = vmatpush1.msra.mxu0 %v186
  %503 = vmatprep.subr.mxu0 0.0
  %504 = vmatpush1.msra.mxu0 0.0
  %505 = vmatprep.subr.mxu0 0.0
  %506 = vmatpush1.msra.mxu0 0.0
  %507 = vmatprep.subr.mxu0 0.0
  %508 = vmatpush1.msra.mxu0 0.0
  %509 = vmatprep.subr.mxu0 0.0
  %510 = vmatpush1.msra.mxu0 0.0
  %511 = vmatprep.subr.mxu0 0.0
  %512 = vmatpush1.msra.mxu0 0.0
  %513 = vmatprep.subr.mxu0 0.0
  %514 = vmatpush1.msra.mxu0 0.0
  %515 = vmatprep.subr.mxu0 0.0
  %516 = vmatpush1.msra.mxu0 0.0
  %517 = vmatprep.subr.mxu0 0.0
  %518 = vmatpush1.msra.mxu0 0.0
  %519 = vmatprep.subr.mxu0 0.0
  %520 = vmatpush1.msra.mxu0 0.0
  %521 = vmatprep.subr.mxu0 0.0
  %522 = vmatpush1.msra.mxu0 0.0
  %523 = vmatprep.subr.mxu0 0.0
  %524 = vmatpush1.msra.mxu0 0.0
  %525 = vmatprep.subr.mxu0 0.0
  %526 = vmatpush1.msra.mxu0 0.0
  %527 = vmatprep.subr.mxu0 0.0
  %528 = vmatpush1.msra.mxu0 0.0
  %529 = vmatprep.subr.mxu0 0.0
  %530 = vmatpush1.msra.mxu0 0.0
  %531 = vmatprep.subr.mxu0 0.0
  %532 = vmatpush1.msra.mxu0 0.0
  %533 = vmatprep.subr.mxu0 0.0
  %534 = vmatpush1.msra.mxu0 0.0
  %535 = vmatprep.subr.mxu0 0.0
  %536 = vmatpush1.msra.mxu0 0.0
  %537 = vmatprep.subr.mxu0 0.0
  %538 = vmatpush1.msra.mxu0 0.0
  %539 = vmatprep.subr.mxu0 0.0
  %540 = vmatpush1.msra.mxu0 0.0
  %541 = vmatprep.subr.mxu0 0.0
  %542 = vmatpush1.msra.mxu0 0.0
  %543 = vmatprep.subr.mxu0 0.0
  %544 = vmatpush1.msra.mxu0 0.0
  %545 = vmatprep.subr.mxu0 0.0
  %546 = vmatpush1.msra.mxu0 0.0
  %547 = vmatprep.subr.mxu0 0.0
  %548 = vmatpush1.msra.mxu0 0.0
  %549 = vmatprep.subr.mxu0 0.0
  %550 = vmatpush1.msra.mxu0 0.0
  %551 = vmatprep.subr.mxu0 0.0
  %552 = vmatpush1.msra.mxu0 0.0
  %553 = vmatprep.subr.mxu0 0.0
  %554 = vmatpush1.msra.mxu0 0.0
  %555 = vmatprep.subr.mxu0 0.0
  %556 = vmatpush1.msra.mxu0 0.0
  %557 = vmatprep.subr.mxu0 0.0
  %558 = vmatpush1.msra.mxu0 0.0
  %559 = vmatprep.mubr.f32.mxu0 0.0
  %560 = vmatmul.mubr.f32.gmra.mrb[0].mxu0 %v493
  %v561 = vpop.f32.mrb[0].mxu0
  %v562 = vadd.f32 0.0, %v561
  %v563 = vpop.f32.mrb[0].mxu0
  %564 = vdwg.mxu0
  %v565 = vadd.f32 %v489, %v562
  %v566 = vxor.u32 %v565, 2147483648
  %v567 = vmul.f32 %v566, 1.442695
  %v568 = vpow.pop %v567
  %v569 = vadd.f32 %v568, 1.0
  %v570 = vrcp.pop %v569
  %v571 = vmul.f32 1.0, %v570
  %v572 = vtanh.pop %v565
  %v573 = vmul.f32 %v571, %v482
  %575 = vrot.lane.b32.xlu0 %v572, 32
  %v576 = vpop.permute.xlu0 %575
  %v578 = vmul.f32 %v571, %v576
  %580 = vrot.lane.b32.xlu0 %v578, 32
  %v581 = vpop.permute.xlu0 %580
  %v583 = vadd.f32 %v573, %v581
  %v584 = vtanh.pop %v583
  %586 = vrot.lane.b32.xlu0 %v584, 32
  %v587 = vpop.permute.xlu0 %586
  %v589 = vmul.f32 %v571, %v587
  %v590 = vld [vmem:[#allocation2 + $0x20] sm:$0xff]
  %592 = vrot.lane.b32.xlu0 %v589, 64
  %v593 = vpop.permute.xlu0 %592
  %v594 = vsel %vm188, %v593, 0
  %596 = vmatprep.subr.mxu0 0.0
  %597 = vmatpush1.msra.mxu0 %v183
  %598 = vmatprep.subr.mxu0 0.0
  %599 = vmatpush1.msra.mxu0 %v184
  %600 = vmatprep.subr.mxu0 0.0
  %601 = vmatpush1.msra.mxu0 %v185
  %602 = vmatprep.subr.mxu0 0.0
  %603 = vmatpush1.msra.mxu0 %v186
  %604 = vmatprep.subr.mxu0 0.0
  %605 = vmatpush1.msra.mxu0 0.0
  %606 = vmatprep.subr.mxu0 0.0
  %607 = vmatpush1.msra.mxu0 0.0
  %608 = vmatprep.subr.mxu0 0.0
  %609 = vmatpush1.msra.mxu0 0.0
  %610 = vmatprep.subr.mxu0 0.0
  %611 = vmatpush1.msra.mxu0 0.0
  %612 = vmatprep.subr.mxu0 0.0
  %613 = vmatpush1.msra.mxu0 0.0
  %614 = vmatprep.subr.mxu0 0.0
  %615 = vmatpush1.msra.mxu0 0.0
  %616 = vmatprep.subr.mxu0 0.0
  %617 = vmatpush1.msra.mxu0 0.0
  %618 = vmatprep.subr.mxu0 0.0
  %619 = vmatpush1.msra.mxu0 0.0
  %620 = vmatprep.subr.mxu0 0.0
  %621 = vmatpush1.msra.mxu0 0.0
  %622 = vmatprep.subr.mxu0 0.0
  %623 = vmatpush1.msra.mxu0 0.0
  %624 = vmatprep.subr.mxu0 0.0
  %625 = vmatpush1.msra.mxu0 0.0
  %626 = vmatprep.subr.mxu0 0.0
  %627 = vmatpush1.msra.mxu0 0.0
  %628 = vmatprep.subr.mxu0 0.0
  %629 = vmatpush1.msra.mxu0 0.0
  %630 = vmatprep.subr.mxu0 0.0
  %631 = vmatpush1.msra.mxu0 0.0
  %632 = vmatprep.subr.mxu0 0.0
  %633 = vmatpush1.msra.mxu0 0.0
  %634 = vmatprep.subr.mxu0 0.0
  %635 = vmatpush1.msra.mxu0 0.0
  %636 = vmatprep.subr.mxu0 0.0
  %637 = vmatpush1.msra.mxu0 0.0
  %638 = vmatprep.subr.mxu0 0.0
  %639 = vmatpush1.msra.mxu0 0.0
  %640 = vmatprep.subr.mxu0 0.0
  %641 = vmatpush1.msra.mxu0 0.0
  %642 = vmatprep.subr.mxu0 0.0
  %643 = vmatpush1.msra.mxu0 0.0
  %644 = vmatprep.subr.mxu0 0.0
  %645 = vmatpush1.msra.mxu0 0.0
  %646 = vmatprep.subr.mxu0 0.0
  %647 = vmatpush1.msra.mxu0 0.0
  %648 = vmatprep.subr.mxu0 0.0
  %649 = vmatpush1.msra.mxu0 0.0
  %650 = vmatprep.subr.mxu0 0.0
  %651 = vmatpush1.msra.mxu0 0.0
  %652 = vmatprep.subr.mxu0 0.0
  %653 = vmatpush1.msra.mxu0 0.0
  %654 = vmatprep.subr.mxu0 0.0
  %655 = vmatpush1.msra.mxu0 0.0
  %656 = vmatprep.subr.mxu0 0.0
  %657 = vmatpush1.msra.mxu0 0.0
  %658 = vmatprep.subr.mxu0 0.0
  %659 = vmatpush1.msra.mxu0 0.0
  %660 = vmatprep.mubr.f32.mxu0 0.0
  %661 = vmatmul.mubr.f32.gmra.mrb[0].mxu0 %v594
  %v662 = vpop.f32.mrb[0].mxu0
  %v663 = vadd.f32 0.0, %v662
  %v664 = vpop.f32.mrb[0].mxu0
  %665 = vdwg.mxu0
  %v666 = vadd.f32 %v590, %v663
  %v667 = vxor.u32 %v666, 2147483648
  %v668 = vmul.f32 %v667, 1.442695
  %v669 = vpow.pop %v668
  %v670 = vadd.f32 %v669, 1.0
  %v671 = vrcp.pop %v670
  %v672 = vmul.f32 1.0, %v671
  %v673 = vtanh.pop %v666
  %v674 = vmul.f32 %v672, %v583
  %676 = vrot.lane.b32.xlu0 %v673, 32
  %v677 = vpop.permute.xlu0 %676
  %v679 = vmul.f32 %v672, %v677
  %681 = vrot.lane.b32.xlu0 %v679, 32
  %v682 = vpop.permute.xlu0 %681
  %v684 = vadd.f32 %v674, %v682
  %v685 = vtanh.pop %v684
  %687 = vrot.lane.b32.xlu0 %v685, 32
  %v688 = vpop.permute.xlu0 %687
  %v690 = vmul.f32 %v672, %v688
  %v691 = vld [vmem:[#allocation2 + $0x28] sm:$0xff]
  %693 = vrot.lane.b32.xlu0 %v690, 64
  %v694 = vpop.permute.xlu0 %693
  %v695 = vsel %vm188, %v694, 0
  %697 = vmatprep.subr.mxu0 0.0
  %698 = vmatpush1.msra.mxu0 %v183
  %699 = vmatprep.subr.mxu0 0.0
  %700 = vmatpush1.msra.mxu0 %v184
  %701 = vmatprep.subr.mxu0 0.0
  %702 = vmatpush1.msra.mxu0 %v185
  %703 = vmatprep.subr.mxu0 0.0
  %704 = vmatpush1.msra.mxu0 %v186
  %705 = vmatprep.subr.mxu0 0.0
  %706 = vmatpush1.msra.mxu0 0.0
  %707 = vmatprep.subr.mxu0 0.0
  %708 = vmatpush1.msra.mxu0 0.0
  %709 = vmatprep.subr.mxu0 0.0
  %710 = vmatpush1.msra.mxu0 0.0
  %711 = vmatprep.subr.mxu0 0.0
  %712 = vmatpush1.msra.mxu0 0.0
  %713 = vmatprep.subr.mxu0 0.0
  %714 = vmatpush1.msra.mxu0 0.0
  %715 = vmatprep.subr.mxu0 0.0
  %716 = vmatpush1.msra.mxu0 0.0
  %717 = vmatprep.subr.mxu0 0.0
  %718 = vmatpush1.msra.mxu0 0.0
  %719 = vmatprep.subr.mxu0 0.0
  %720 = vmatpush1.msra.mxu0 0.0
  %721 = vmatprep.subr.mxu0 0.0
  %722 = vmatpush1.msra.mxu0 0.0
  %723 = vmatprep.subr.mxu0 0.0
  %724 = vmatpush1.msra.mxu0 0.0
  %725 = vmatprep.subr.mxu0 0.0
  %726 = vmatpush1.msra.mxu0 0.0
  %727 = vmatprep.subr.mxu0 0.0
  %728 = vmatpush1.msra.mxu0 0.0
  %729 = vmatprep.subr.mxu0 0.0
  %730 = vmatpush1.msra.mxu0 0.0
  %731 = vmatprep.subr.mxu0 0.0
  %732 = vmatpush1.msra.mxu0 0.0
  %733 = vmatprep.subr.mxu0 0.0
  %734 = vmatpush1.msra.mxu0 0.0
  %735 = vmatprep.subr.mxu0 0.0
  %736 = vmatpush1.msra.mxu0 0.0
  %737 = vmatprep.subr.mxu0 0.0
  %738 = vmatpush1.msra.mxu0 0.0
  %739 = vmatprep.subr.mxu0 0.0
  %740 = vmatpush1.msra.mxu0 0.0
  %741 = vmatprep.subr.mxu0 0.0
  %742 = vmatpush1.msra.mxu0 0.0
  %743 = vmatprep.subr.mxu0 0.0
  %744 = vmatpush1.msra.mxu0 0.0
  %745 = vmatprep.subr.mxu0 0.0
  %746 = vmatpush1.msra.mxu0 0.0
  %747 = vmatprep.subr.mxu0 0.0
  %748 = vmatpush1.msra.mxu0 0.0
  %749 = vmatprep.subr.mxu0 0.0
  %750 = vmatpush1.msra.mxu0 0.0
  %751 = vmatprep.subr.mxu0 0.0
  %752 = vmatpush1.msra.mxu0 0.0
  %753 = vmatprep.subr.mxu0 0.0
  %754 = vmatpush1.msra.mxu0 0.0
  %755 = vmatprep.subr.mxu0 0.0
  %756 = vmatpush1.msra.mxu0 0.0
  %757 = vmatprep.subr.mxu0 0.0
  %758 = vmatpush1.msra.mxu0 0.0
  %759 = vmatprep.subr.mxu0 0.0
  %760 = vmatpush1.msra.mxu0 0.0
  %761 = vmatprep.mubr.f32.mxu0 0.0
  %762 = vmatmul.mubr.f32.gmra.mrb[0].mxu0 %v695
  %v763 = vpop.f32.mrb[0].mxu0
  %v764 = vadd.f32 0.0, %v763
  %v765 = vpop.f32.mrb[0].mxu0
  %766 = vdwg.mxu0
  %v767 = vadd.f32 %v691, %v764
  %v768 = vxor.u32 %v767, 2147483648
  %v769 = vmul.f32 %v768, 1.442695
  %v770 = vpow.pop %v769
  %v771 = vadd.f32 %v770, 1.0
  %v772 = vrcp.pop %v771
  %v773 = vmul.f32 1.0, %v772
  %v774 = vtanh.pop %v767
  %v775 = vmul.f32 %v773, %v684
  %777 = vrot.lane.b32.xlu0 %v774, 32
  %v778 = vpop.permute.xlu0 %777
  %v780 = vmul.f32 %v773, %v778
  %782 = vrot.lane.b32.xlu0 %v780, 32
  %v783 = vpop.permute.xlu0 %782
  %v785 = vadd.f32 %v775, %v783
  %v786 = vtanh.pop %v785
  %788 = vrot.lane.b32.xlu0 %v786, 32
  %v789 = vpop.permute.xlu0 %788
  %v791 = vmul.f32 %v773, %v789
  %v792 = vld [vmem:[#allocation2 + $0x30] sm:$0xff]
  %794 = vrot.lane.b32.xlu0 %v791, 64
  %v795 = vpop.permute.xlu0 %794
  %v796 = vsel %vm188, %v795, 0
  %798 = vmatprep.subr.mxu0 0.0
  %799 = vmatpush1.msra.mxu0 %v183
  %800 = vmatprep.subr.mxu0 0.0
  %801 = vmatpush1.msra.mxu0 %v184
  %802 = vmatprep.subr.mxu0 0.0
  %803 = vmatpush1.msra.mxu0 %v185
  %804 = vmatprep.subr.mxu0 0.0
  %805 = vmatpush1.msra.mxu0 %v186
  %806 = vmatprep.subr.mxu0 0.0
  %807 = vmatpush1.msra.mxu0 0.0
  %808 = vmatprep.subr.mxu0 0.0
  %809 = vmatpush1.msra.mxu0 0.0
  %810 = vmatprep.subr.mxu0 0.0
  %811 = vmatpush1.msra.mxu0 0.0
  %812 = vmatprep.subr.mxu0 0.0
  %813 = vmatpush1.msra.mxu0 0.0
  %814 = vmatprep.subr.mxu0 0.0
  %815 = vmatpush1.msra.mxu0 0.0
  %816 = vmatprep.subr.mxu0 0.0
  %817 = vmatpush1.msra.mxu0 0.0
  %818 = vmatprep.subr.mxu0 0.0
  %819 = vmatpush1.msra.mxu0 0.0
  %820 = vmatprep.subr.mxu0 0.0
  %821 = vmatpush1.msra.mxu0 0.0
  %822 = vmatprep.subr.mxu0 0.0
  %823 = vmatpush1.msra.mxu0 0.0
  %824 = vmatprep.subr.mxu0 0.0
  %825 = vmatpush1.msra.mxu0 0.0
  %826 = vmatprep.subr.mxu0 0.0
  %827 = vmatpush1.msra.mxu0 0.0
  %828 = vmatprep.subr.mxu0 0.0
  %829 = vmatpush1.msra.mxu0 0.0
  %830 = vmatprep.subr.mxu0 0.0
  %831 = vmatpush1.msra.mxu0 0.0
  %832 = vmatprep.subr.mxu0 0.0
  %833 = vmatpush1.msra.mxu0 0.0
  %834 = vmatprep.subr.mxu0 0.0
  %835 = vmatpush1.msra.mxu0 0.0
  %836 = vmatprep.subr.mxu0 0.0
  %837 = vmatpush1.msra.mxu0 0.0
  %838 = vmatprep.subr.mxu0 0.0
  %839 = vmatpush1.msra.mxu0 0.0
  %840 = vmatprep.subr.mxu0 0.0
  %841 = vmatpush1.msra.mxu0 0.0
  %842 = vmatprep.subr.mxu0 0.0
  %843 = vmatpush1.msra.mxu0 0.0
  %844 = vmatprep.subr.mxu0 0.0
  %845 = vmatpush1.msra.mxu0 0.0
  %846 = vmatprep.subr.mxu0 0.0
  %847 = vmatpush1.msra.mxu0 0.0
  %848 = vmatprep.subr.mxu0 0.0
  %849 = vmatpush1.msra.mxu0 0.0
  %850 = vmatprep.subr.mxu0 0.0
  %851 = vmatpush1.msra.mxu0 0.0
  %852 = vmatprep.subr.mxu0 0.0
  %853 = vmatpush1.msra.mxu0 0.0
  %854 = vmatprep.subr.mxu0 0.0
  %855 = vmatpush1.msra.mxu0 0.0
  %856 = vmatprep.subr.mxu0 0.0
  %857 = vmatpush1.msra.mxu0 0.0
  %858 = vmatprep.subr.mxu0 0.0
  %859 = vmatpush1.msra.mxu0 0.0
  %860 = vmatprep.subr.mxu0 0.0
  %861 = vmatpush1.msra.mxu0 0.0
  %862 = vmatprep.mubr.f32.mxu0 0.0
  %863 = vmatmul.mubr.f32.gmra.mrb[0].mxu0 %v796
  %v864 = vpop.f32.mrb[0].mxu0
  %v865 = vadd.f32 0.0, %v864
  %v866 = vpop.f32.mrb[0].mxu0
  %867 = vdwg.mxu0
  %v868 = vadd.f32 %v792, %v865
  %v869 = vxor.u32 %v868, 2147483648
  %v870 = vmul.f32 %v869, 1.442695
  %v871 = vpow.pop %v870
  %v872 = vadd.f32 %v871, 1.0
  %v873 = vrcp.pop %v872
  %v874 = vmul.f32 1.0, %v873
  %v875 = vtanh.pop %v868
  %v876 = vmul.f32 %v874, %v785
  %878 = vrot.lane.b32.xlu0 %v875, 32
  %v879 = vpop.permute.xlu0 %878
  %v881 = vmul.f32 %v874, %v879
  %883 = vrot.lane.b32.xlu0 %v881, 32
  %v884 = vpop.permute.xlu0 %883
  %v886 = vadd.f32 %v876, %v884
  %v887 = vtanh.pop %v886
  %889 = vrot.lane.b32.xlu0 %v887, 32
  %v890 = vpop.permute.xlu0 %889
  %v892 = vmul.f32 %v874, %v890
  %v893 = vld [vmem:[#allocation2 + $0x38] sm:$0xff]
  %895 = vrot.lane.b32.xlu0 %v892, 64
  %v896 = vpop.permute.xlu0 %895
  %v897 = vsel %vm188, %v896, 0
  %899 = vmatprep.subr.mxu0 0.0
  %900 = vmatpush1.msra.mxu0 %v183
  %901 = vmatprep.subr.mxu0 0.0
  %902 = vmatpush1.msra.mxu0 %v184
  %903 = vmatprep.subr.mxu0 0.0
  %904 = vmatpush1.msra.mxu0 %v185
  %905 = vmatprep.subr.mxu0 0.0
  %906 = vmatpush1.msra.mxu0 %v186
  %907 = vmatprep.subr.mxu0 0.0
  %908 = vmatpush1.msra.mxu0 0.0
  %909 = vmatprep.subr.mxu0 0.0
  %910 = vmatpush1.msra.mxu0 0.0
  %911 = vmatprep.subr.mxu0 0.0
  %912 = vmatpush1.msra.mxu0 0.0
  %913 = vmatprep.subr.mxu0 0.0
  %914 = vmatpush1.msra.mxu0 0.0
  %915 = vmatprep.subr.mxu0 0.0
  %916 = vmatpush1.msra.mxu0 0.0
  %917 = vmatprep.subr.mxu0 0.0
  %918 = vmatpush1.msra.mxu0 0.0
  %919 = vmatprep.subr.mxu0 0.0
  %920 = vmatpush1.msra.mxu0 0.0
  %921 = vmatprep.subr.mxu0 0.0
  %922 = vmatpush1.msra.mxu0 0.0
  %923 = vmatprep.subr.mxu0 0.0
  %924 = vmatpush1.msra.mxu0 0.0
  %925 = vmatprep.subr.mxu0 0.0
  %926 = vmatpush1.msra.mxu0 0.0
  %927 = vmatprep.subr.mxu0 0.0
  %928 = vmatpush1.msra.mxu0 0.0
  %929 = vmatprep.subr.mxu0 0.0
  %930 = vmatpush1.msra.mxu0 0.0
  %931 = vmatprep.subr.mxu0 0.0
  %932 = vmatpush1.msra.mxu0 0.0
  %933 = vmatprep.subr.mxu0 0.0
  %934 = vmatpush1.msra.mxu0 0.0
  %935 = vmatprep.subr.mxu0 0.0
  %936 = vmatpush1.msra.mxu0 0.0
  %937 = vmatprep.subr.mxu0 0.0
  %938 = vmatpush1.msra.mxu0 0.0
  %939 = vmatprep.subr.mxu0 0.0
  %940 = vmatpush1.msra.mxu0 0.0
  %941 = vmatprep.subr.mxu0 0.0
  %942 = vmatpush1.msra.mxu0 0.0
  %943 = vmatprep.subr.mxu0 0.0
  %944 = vmatpush1.msra.mxu0 0.0
  %945 = vmatprep.subr.mxu0 0.0
  %946 = vmatpush1.msra.mxu0 0.0
  %947 = vmatprep.subr.mxu0 0.0
  %948 = vmatpush1.msra.mxu0 0.0
  %949 = vmatprep.subr.mxu0 0.0
  %950 = vmatpush1.msra.mxu0 0.0
  %951 = vmatprep.subr.mxu0 0.0
  %952 = vmatpush1.msra.mxu0 0.0
  %953 = vmatprep.subr.mxu0 0.0
  %954 = vmatpush1.msra.mxu0 0.0
  %955 = vmatprep.subr.mxu0 0.0
  %956 = vmatpush1.msra.mxu0 0.0
  %957 = vmatprep.subr.mxu0 0.0
  %958 = vmatpush1.msra.mxu0 0.0
  %959 = vmatprep.subr.mxu0 0.0
  %960 = vmatpush1.msra.mxu0 0.0
  %961 = vmatprep.subr.mxu0 0.0
  %962 = vmatpush1.msra.mxu0 0.0
  %963 = vmatprep.mubr.f32.mxu0 0.0
  %964 = vmatmul.mubr.f32.gmra.mrb[0].mxu0 %v897
  %v965 = vpop.f32.mrb[0].mxu0
  %v966 = vadd.f32 0.0, %v965
  %v967 = vpop.f32.mrb[0].mxu0
  %968 = vdwg.mxu0
  %v969 = vadd.f32 %v893, %v966
  %v970 = vxor.u32 %v969, 2147483648
  %v971 = vmul.f32 %v970, 1.442695
  %v972 = vpow.pop %v971
  %v973 = vadd.f32 %v972, 1.0
  %v974 = vrcp.pop %v973
  %v975 = vmul.f32 1.0, %v974
  %v976 = vtanh.pop %v969
  %v977 = vmul.f32 %v975, %v886
  %979 = vrot.lane.b32.xlu0 %v976, 32
  %v980 = vpop.permute.xlu0 %979
  %v982 = vmul.f32 %v975, %v980
  %984 = vrot.lane.b32.xlu0 %v982, 32
  %v985 = vpop.permute.xlu0 %984
  %v987 = vadd.f32 %v977, %v985
  %v988 = vtanh.pop %v987
  %990 = vrot.lane.b32.xlu0 %v988, 32
  %v991 = vpop.permute.xlu0 %990
  %v993 = vmul.f32 %v975, %v991
  %v994 = vld [vmem:[%s4] sm:$0xff]
  %v995 = vld [vmem:[%s4 + $0x8] sm:$0xff]
  %v996 = vld [vmem:[%s4 + $0x10] sm:$0xff]
  %v997 = vld [vmem:[%s4 + $0x18] sm:$0xff]
  %v998 = vld [vmem:[#allocation3] sm:$0x1]
  %v1000 = vlaneseq
  %v1001 = vshrl.u32 %v1000, 7
  %v1002 = vsub.s32 0, %v1001
  %v1003 = vrot.slane %v998, %v1002
  %1006 = vrot.lane.b32.xlu0 %v993, 64
  %v1007 = vpop.permute.xlu0 %1006
  %v1008 = vsel %vm188, %v1007, 0
  %1010 = vmatprep.subr.mxu0 0.0
  %1011 = vmatpush1.msra.mxu0 %v994
  %1012 = vmatprep.subr.mxu0 0.0
  %1013 = vmatpush1.msra.mxu0 %v995
  %1014 = vmatprep.subr.mxu0 0.0
  %1015 = vmatpush1.msra.mxu0 %v996
  %1016 = vmatprep.subr.mxu0 0.0
  %1017 = vmatpush1.msra.mxu0 %v997
  %1018 = vmatprep.subr.mxu0 0.0
  %1019 = vmatpush1.msra.mxu0 0.0
  %1020 = vmatprep.subr.mxu0 0.0
  %1021 = vmatpush1.msra.mxu0 0.0
  %1022 = vmatprep.subr.mxu0 0.0
  %1023 = vmatpush1.msra.mxu0 0.0
  %1024 = vmatprep.subr.mxu0 0.0
  %1025 = vmatpush1.msra.mxu0 0.0
  %1026 = vmatprep.subr.mxu0 0.0
  %1027 = vmatpush1.msra.mxu0 0.0
  %1028 = vmatprep.subr.mxu0 0.0
  %1029 = vmatpush1.msra.mxu0 0.0
  %1030 = vmatprep.subr.mxu0 0.0
  %1031 = vmatpush1.msra.mxu0 0.0
  %1032 = vmatprep.subr.mxu0 0.0
  %1033 = vmatpush1.msra.mxu0 0.0
  %1034 = vmatprep.subr.mxu0 0.0
  %1035 = vmatpush1.msra.mxu0 0.0
  %1036 = vmatprep.subr.mxu0 0.0
  %1037 = vmatpush1.msra.mxu0 0.0
  %1038 = vmatprep.subr.mxu0 0.0
  %1039 = vmatpush1.msra.mxu0 0.0
  %1040 = vmatprep.subr.mxu0 0.0
  %1041 = vmatpush1.msra.mxu0 0.0
  %1042 = vmatprep.subr.mxu0 0.0
  %1043 = vmatpush1.msra.mxu0 0.0
  %1044 = vmatprep.subr.mxu0 0.0
  %1045 = vmatpush1.msra.mxu0 0.0
  %1046 = vmatprep.subr.mxu0 0.0
  %1047 = vmatpush1.msra.mxu0 0.0
  %1048 = vmatprep.subr.mxu0 0.0
  %1049 = vmatpush1.msra.mxu0 0.0
  %1050 = vmatprep.subr.mxu0 0.0
  %1051 = vmatpush1.msra.mxu0 0.0
  %1052 = vmatprep.subr.mxu0 0.0
  %1053 = vmatpush1.msra.mxu0 0.0
  %1054 = vmatprep.subr.mxu0 0.0
  %1055 = vmatpush1.msra.mxu0 0.0
  %1056 = vmatprep.subr.mxu0 0.0
  %1057 = vmatpush1.msra.mxu0 0.0
  %1058 = vmatprep.subr.mxu0 0.0
  %1059 = vmatpush1.msra.mxu0 0.0
  %1060 = vmatprep.subr.mxu0 0.0
  %1061 = vmatpush1.msra.mxu0 0.0
  %1062 = vmatprep.subr.mxu0 0.0
  %1063 = vmatpush1.msra.mxu0 0.0
  %1064 = vmatprep.subr.mxu0 0.0
  %1065 = vmatpush1.msra.mxu0 0.0
  %1066 = vmatprep.subr.mxu0 0.0
  %1067 = vmatpush1.msra.mxu0 0.0
  %1068 = vmatprep.subr.mxu0 0.0
  %1069 = vmatpush1.msra.mxu0 0.0
  %1070 = vmatprep.subr.mxu0 0.0
  %1071 = vmatpush1.msra.mxu0 0.0
  %1072 = vmatprep.subr.mxu0 0.0
  %1073 = vmatpush1.msra.mxu0 0.0
  %1074 = vmatprep.mubr.f32.mxu0 0.0
  %1075 = vmatmul.mubr.f32.gmra.mrb[0].mxu0 %v1008
  %v1076 = vpop.f32.mrb[0].mxu0
  %v1077 = vadd.f32 %v1003, %v1076
  %v1078 = vpop.f32.mrb[0].mxu0
  %1079 = vdwg.mxu0
  %1080 = vst.msk [vmem:[%s6] sm:$0xff] %vm41, %v1077
  // Predicated region
  $region26: #{tpu_custom_call.1} parent=0 // pred_check
    _
  $region27: #{tpu_custom_call.1} parent=0 // pred_check_branch
    %1082 = sbr.rel (0) target = $region29
  $region28: #{tpu_custom_call.1} parent=0 // pred_region
    _
  $region29: #{tpu_custom_call.1} parent=0 // pred_fallthru
    _
  // Predicated region
  $region30: #{tpu_custom_call.1} parent=0 // pred_check
    _
  $region31: #{tpu_custom_call.1} parent=0 // pred_check_branch
    %1084 = sbr.rel (0) target = $region33
  $region32: #{tpu_custom_call.1} parent=0 // pred_region
    _
  $region33: #{tpu_custom_call.1} parent=0 // pred_fallthru
    _

</llo_original>
